<compile_context>
chip_gen: v7x
topology: tpu7x:2x2x1
jax: 0.10.0
libtpu: 0.0.40
codegen_flags: <defaults>
</compile_context>

<pallas_src>
import jax
import jax.numpy as jnp
from jax.experimental import pallas as pl
from jax.experimental.pallas import tpu as pltpu


def _round_up(x, m):
    return ((x + m - 1) // m) * m


def _sublane_multiple(dtype):
    # 8 sublanes of 32-bit; sub-32-bit dtypes pack along sublanes.
    return 32 // jnp.dtype(dtype).itemsize


# ---------------------------------------------------------------------------
# Kernels
# ---------------------------------------------------------------------------
def _resident_kernel(x_ref, wt_ref, b_ref, o_ref):
    # Whole weight (K, N) resident in VMEM; one MXU matmul per M tile.
    acc = jnp.dot(x_ref[...], wt_ref[...], preferred_element_type=jnp.float32)
    o_ref[...] = (acc + b_ref[...].astype(jnp.float32)).astype(o_ref.dtype)


def _tiled_kernel_f32out(x_ref, wt_ref, b_ref, o_ref):
    # f32 output: accumulate directly into the resident output block (no scratch).
    k = pl.program_id(2)

    @pl.when(k == 0)
    def _():
        o_ref[...] = jnp.zeros_like(o_ref)

    o_ref[...] += jnp.dot(x_ref[...], wt_ref[...],
                          preferred_element_type=jnp.float32)

    @pl.when(k == pl.num_programs(2) - 1)
    def _():
        o_ref[...] += b_ref[...].astype(o_ref.dtype)


def _tiled_kernel_acc(x_ref, wt_ref, b_ref, o_ref, acc_ref):
    # Narrow output dtype: keep an f32 VMEM accumulator, cast in the epilogue.
    k = pl.program_id(2)

    @pl.when(k == 0)
    def _():
        acc_ref[...] = jnp.zeros_like(acc_ref)

    acc_ref[...] += jnp.dot(x_ref[...], wt_ref[...],
                            preferred_element_type=jnp.float32)

    @pl.when(k == pl.num_programs(2) - 1)
    def _():
        o_ref[...] = (acc_ref[...] + b_ref[...].astype(jnp.float32)).astype(o_ref.dtype)


# ---------------------------------------------------------------------------
# Wrapper
# ---------------------------------------------------------------------------
def prepare_linear_weight(weight, compute_dtype=None):
    """One-time parameter-setup transform: (out_ch, in_ch) -> (in_ch, out_ch).

    Do this once (at param load / outside the hot path) so the kernel never
    needs an in-kernel transpose and no per-call HBM weight copy is made.
    """
    wt = weight.T
    if compute_dtype is not None:
        wt = wt.astype(compute_dtype)
    return wt


def linear_norm_forward(
    x,
    weight_t,                 # (in_channels, out_channels) == W^T, see prepare_linear_weight
    bias=None,                # (out_channels,) or None
    *,
    tile_m=512,
    tile_n=512,
    tile_k=1024,              # portable (v5e/v6e/v7x) defaults; v6e can raise tn/tk further
    compute_dtype=None,       # e.g. jnp.bfloat16 for 3-4x MXU throughput (f32 accumulation kept)
    vmem_limit_bytes=32 * 1024 * 1024,
    weight_resident_budget=24 * 1024 * 1024,
):
    """Computes x @ W^T + b (nn.Linear forward) with a tiled Pallas TPU kernel."""
    K, N = weight_t.shape
    orig_shape = x.shape
    assert orig_shape[-1] == K, "x last dim must equal in_channels"
    x2d = x.reshape(-1, K)
    M = x2d.shape[0]
    out_dtype = x.dtype

    if compute_dtype is not None:
        x2d = x2d.astype(compute_dtype)
        weight_t = weight_t.astype(compute_dtype)

    if bias is None:
        bias = jnp.zeros((N,), dtype=out_dtype)
    b2d = bias.reshape(1, N)

    x_isz = jnp.dtype(x2d.dtype).itemsize
    w_isz = jnp.dtype(weight_t.dtype).itemsize
    o_isz = jnp.dtype(out_dtype).itemsize

    # dtype-aware sublane rounding (8 f32 / 16 bf16 / 32 int8).
    sub = _sublane_multiple(x2d.dtype)
    tm = min(tile_m, _round_up(M, sub))
    # Expose >= 2 parallel M steps when possible (v7x megacore balance; the extra
    # ~0.35us grid step is negligible on single-TC chips).
    if pl.cdiv(M, tm) < 2 and M > sub:
        tm = _round_up(pl.cdiv(M, 2), sub)
    grid_m = pl.cdiv(M, tm)

    cost = pl.CostEstimate(
        flops=2 * M * N * K,
        transcendentals=0,
        bytes_accessed=M * K * x_isz + K * N * w_isz + M * N * o_isz + N * o_isz,
    )

    # ---------------- Path A: weight-resident (small/medium layers) ----------------
    # Whole W^T + bias stay in VMEM (constant index_map -> fetched once); each
    # operand is read from HBM exactly once.  No padding needed anywhere: block
    # dims either match full array extents or are sublane/lane-aligned.
    resident_bytes = (K * N * w_isz + N * o_isz          # weight + bias (single buffer)
                      + 2 * tm * K * x_isz               # double-buffered x tile
                      + 2 * tm * N * o_isz)              # double-buffered out tile
    if resident_bytes <= weight_resident_budget:
        out2d = pl.pallas_call(
            _resident_kernel,
            out_shape=jax.ShapeDtypeStruct((M, N), out_dtype),
            grid_spec=pltpu.PrefetchScalarGridSpec(
                num_scalar_prefetch=0,
                grid=(grid_m,),
                in_specs=[
                    pl.BlockSpec((tm, K), lambda i: (i, 0)),   # x tile
                    pl.BlockSpec((K, N), lambda i: (0, 0)),    # whole W^T, resident
                    pl.BlockSpec((1, N), lambda i: (0, 0)),    # bias, resident
                ],
                out_specs=pl.BlockSpec((tm, N), lambda i: (i, 0)),
            ),
            compiler_params=pltpu.CompilerParams(
                dimension_semantics=("parallel",),
                vmem_limit_bytes=vmem_limit_bytes,
            ),
            cost_estimate=cost,
        )(x2d, weight_t, b2d)
        return out2d.reshape(*orig_shape[:-1], N)

    # ---------------- Path B: generic tiled matmul ----------------
    tn = min(tile_n, _round_up(N, 128))
    if K <= tile_k:
        tk = K                      # whole K in one block -> no K padding needed
        kp = K
    else:
        tk = tile_k
        kp = _round_up(K, tk)
        if kp != K:
            # Only the K tail must be exact zeros (it sums into valid outputs).
            # Rare case (ragged K > tile_k); M/N edges use masked partial blocks.
            x2d = jnp.pad(x2d, ((0, 0), (0, kp - K)))
            weight_t = jnp.pad(weight_t, ((0, kp - K), (0, 0)))

    grid = (grid_m, pl.cdiv(N, tn), pl.cdiv(kp, tk))     # K last = reduction axis

    if jnp.dtype(out_dtype) == jnp.dtype(jnp.float32):
        kernel = _tiled_kernel_f32out
        scratch = []                                     # accumulate directly in o_ref
    else:
        kernel = _tiled_kernel_acc
        scratch = [pltpu.VMEM((tm, tn), jnp.float32)]

    out2d = pl.pallas_call(
        kernel,
        out_shape=jax.ShapeDtypeStruct((M, N), out_dtype),
        grid_spec=pltpu.PrefetchScalarGridSpec(
            num_scalar_prefetch=0,
            grid=grid,
            in_specs=[
                pl.BlockSpec((tm, tk), lambda i, j, k: (i, k)),   # x tile
                pl.BlockSpec((tk, tn), lambda i, j, k: (k, j)),   # W^T tile (no transpose)
                pl.BlockSpec((1, tn), lambda i, j, k: (0, j)),    # bias tile
            ],
            out_specs=pl.BlockSpec((tm, tn), lambda i, j, k: (i, j)),
            scratch_shapes=scratch,
        ),
        compiler_params=pltpu.CompilerParams(
            dimension_semantics=("parallel", "parallel", "arbitrary"),
            vmem_limit_bytes=vmem_limit_bytes,
        ),
        cost_estimate=cost,
    )(x2d, weight_t, b2d)
    return out2d.reshape(*orig_shape[:-1], N)


if __name__ == "__main__":
    key = jax.random.PRNGKey(0)
    batch, seq, in_channels, out_channels = 2, 8, 32, 16

    k_x, k_w, k_b = jax.random.split(key, 3)
    x = jax.random.normal(k_x, (batch, seq, in_channels), dtype=jnp.float32)
    # Deterministic parameter init (mimics nn.Linear uniform(-1/sqrt(in), 1/sqrt(in)))
    bound = 1.0 / (in_channels ** 0.5)
    weight = jax.random.uniform(
        k_w, (out_channels, in_channels), minval=-bound, maxval=bound, dtype=jnp.float32
    )
    bias = jax.random.uniform(
        k_b, (out_channels,), minval=-bound, maxval=bound, dtype=jnp.float32
    )
    # TODO(synk): spectral_norm=True branch (power-iteration weight normalization) not
    # implemented; default LinearNorm(spectral_norm=False) forward is reproduced exactly.

    # One-time parameter transform (hoisted out of the per-call hot path).
    weight_t = prepare_linear_weight(weight)

    out = linear_norm_forward(x, weight_t, bias)
    jax.block_until_ready(out)

    # Correctness check against plain JAX reference
    ref = x @ weight.T + bias
    assert out.shape == (batch, seq, out_channels)
    assert jnp.allclose(out, ref, atol=1e-5, rtol=1e-5)
    print("KERNEL_OK")
</pallas_src>

<mosaic_0001>
module attributes {stable_mosaic.version = 11 : i64} {
  func.func @_resident_kernel(%arg0: i32, %arg1: memref<8x32xf32, #tpu.memory_space<vmem>>, %arg2: memref<32x16xf32, #tpu.memory_space<vmem>>, %arg3: memref<1x16xf32, #tpu.memory_space<vmem>>, %arg4: memref<8x16xf32, #tpu.memory_space<vmem>>) attributes {dimension_semantics = [#tpu.dimension_semantics<parallel>], iteration_bounds = array<i64: 2>, scalar_prefetch = 0 : i64, scratch_operands = 0 : i64, tpu.core_type = #tpu.core_type<tc>, window_params = [{transform_indices = @transform_0, window_bounds = array<i64: 8, 32>}, {pipeline_mode = #tpu.pipeline_mode<synchronous>, transform_indices = @transform_1, window_bounds = array<i64: 32, 16>}, {pipeline_mode = #tpu.pipeline_mode<synchronous>, transform_indices = @transform_2, window_bounds = array<i64: 1, 16>}, {transform_indices = @transform_3, window_bounds = array<i64: 8, 16>}]} {
    %c0 = arith.constant 0 : index
    %c0_0 = arith.constant 0 : index
    %0 = vector.load %arg1[%c0, %c0_0] : memref<8x32xf32, #tpu.memory_space<vmem>>, vector<8x32xf32>
    %c0_1 = arith.constant 0 : index
    %c0_2 = arith.constant 0 : index
    %1 = vector.load %arg2[%c0_1, %c0_2] : memref<32x16xf32, #tpu.memory_space<vmem>>, vector<32x16xf32>
    %cst = arith.constant dense<0.000000e+00> : vector<8x16xf32>
    %2 = tpu.matmul %0, %1, %cst {dimension_numbers = #tpu.dot_dimension_numbers<[1], [0], [0], [1], [0, 0, 1, 1], [], []>} : vector<8x32xf32>, vector<32x16xf32>, vector<8x16xf32> -> vector<8x16xf32>
    %c0_3 = arith.constant 0 : index
    %c0_4 = arith.constant 0 : index
    %3 = vector.load %arg3[%c0_3, %c0_4] : memref<1x16xf32, #tpu.memory_space<vmem>>, vector<1x16xf32>
    %4 = vector.broadcast %3 : vector<1x16xf32> to vector<8x16xf32>
    %5 = arith.addf %2, %4 : vector<8x16xf32>
    %c0_5 = arith.constant 0 : index
    %c0_6 = arith.constant 0 : index
    %6 = vector.load %arg4[%c0_5, %c0_6] : memref<8x16xf32, #tpu.memory_space<vmem>>, vector<8x16xf32>
    tpu.vector_store %arg4[%c0_5, %c0_6], %5 {strides = array<i32>} : memref<8x16xf32, #tpu.memory_space<vmem>>, vector<8x16xf32>,
    return
  }
  func.func @transform_0(%arg0: i32) -> (i32, i32) {
    %c0_i32 = arith.constant 0 : i32
    %c0_i32_0 = arith.constant 0 : i32
    return %arg0, %c0_i32 : i32, i32
  }
  func.func @transform_1(%arg0: i32) -> (i32, i32) {
    %c0_i32 = arith.constant 0 : i32
    %c0_i32_0 = arith.constant 0 : i32
    %c0_i32_1 = arith.constant 0 : i32
    return %c0_i32, %c0_i32_0 : i32, i32
  }
  func.func @transform_2(%arg0: i32) -> (i32, i32) {
    %c0_i32 = arith.constant 0 : i32
    %c0_i32_0 = arith.constant 0 : i32
    %c0_i32_1 = arith.constant 0 : i32
    return %c0_i32, %c0_i32_0 : i32, i32
  }
  func.func @transform_3(%arg0: i32) -> (i32, i32) {
    %c0_i32 = arith.constant 0 : i32
    %c0_i32_0 = arith.constant 0 : i32
    return %arg0, %c0_i32 : i32, i32
  }
}

</mosaic_0001>

<llo_original>
// kernel: tpu_custom_call.1
$region0: #{tpu_custom_call.1}
  #allocation0 [shape = 'u32[]', space=smem, size = 0x4, offset = 0x4, fixed_abs, tag = 'smem constant byte address 0x4 - core index']
  #allocation1 [shape = 'u32[144,128]{1,0:T(1,128)}', space=vmem, size = 0x12000, scoped, tag = 'internal scratch']
  %s0 = inlined_call_operand.vmem [shape: f32[16,32], index: 0, kind: input, shape index: {}]
  %s1 = inlined_call_operand.vmem [shape: f32[32,16], index: 1, kind: input, shape index: {}]
  %s2 = inlined_call_operand.vmem [shape: f32[1,16], index: 2, kind: input, shape index: {}]
  %s3 = inlined_call_operand.hbm [shape: f32[16,16], index: 3, kind: output, shape index: {}]
  %s4 = sld [smem:[#allocation0]]
  $region45: #{tpu_custom_call.1} parent=0
    _
  %s6 = ssub.s32 1, %s4
  %s7 = scalar_select 0, %s6, %s4
  $region1: #{tpu_custom_call.1} parent=0
    #allocation2 [shape = 'u8[8192]{0}', space=vmem, size = 0x2000, scoped, tag = 'output window, operand 0']
    #allocation3 [shape = 's32[2]{0}', space=sflag, size = 0x8, scoped, tag = 'scoped memory for tpu_custom_call.1']
    %8 = vsyncpa [#allocation3], 0
    %s9 = scalar_lea.sflag [#allocation3], 1
    %10 = vsyncpa %s9, 0
    loop: start=0, step=1, limit=4
    $region2: #{tpu_custom_call.1} parent=1 // loop_pre_header
      _
    $region3: #{tpu_custom_call.1} parent=1 // loop_header
      %s12 = sphi 0, %s16
      %p13 = scmp.ge.s32.totalorder %s12, 4
      %s22 = sphi 0, %s24
      %s25 = sphi 0, %s22
      %s26 = sphi 0, %s25
      %s42 = sphi 0, %s26
      %s46 = sphi 0, %s46
      %s48 = sphi 0, %s46
      %s49 = sphi 0, %s48
      %s63 = sphi 0, %s49
      %s67 = sphi 0, %s67
      %s69 = sphi 0, %s67
      %s70 = sphi 0, %s69
      %s84 = sphi 0, %s70
      %s90 = sphi 0, %s92
      %s93 = sphi 0, %s90
      %s94 = sphi 0, %s93
      %s110 = sphi 0, %s94
    $region4: #{tpu_custom_call.1} parent=1 // loop_header_branch
      %15 = sbr.rel (%p13) target = $region8
    $region5: #{tpu_custom_call.1} parent=1 // loop_body
      %s17 = ssub.s32 %s12, 1
      %s18 = ssub.s32 %s12, 2
      %s19 = sadd.s32 %s12, 1
      %s20 = ssub.s32 %s12, %s19
      %p21 = scmp.eq.s32.totalorder %s20, 0
      %s23 = sadd.s32 %s22, 1
      %s24 = scalar_select %p21, %s22, %s23
      %p27 = pneg %p21
      %p28 = scmp.eq.s32.totalorder %s12, 1
      %p29 = por %p27, %p28
      %p30 = scmp.ne.s32.totalorder %s22, %s25
      %p31 = scmp.eq.s32.totalorder %s12, 0
      %p32 = por %p30, %p31
      %p33 = scmp.ne.s32.totalorder %s22, %s25
      %p34 = scmp.eq.s32.totalorder %s17, 1
      %p35 = por %p33, %p34
      %p36 = scmp.ne.s32.totalorder %s25, %s26
      %p37 = scmp.eq.s32.totalorder %s17, 0
      %p38 = por %p36, %p37
      %p39 = scmp.ne.s32.totalorder %s25, %s26
      %p40 = scmp.eq.s32.totalorder %s18, 1
      %p41 = por %p39, %p40
      %p43 = scmp.ne.s32.totalorder %s26, %s42
      %p44 = scmp.eq.s32.totalorder %s18, 0
      %p45 = por %p43, %p44
      %s47 = sadd.s32 %s46, 1
      %p50 = scmp.eq.s32.totalorder %s12, 1
      %p51 = scmp.ne.s32.totalorder %s46, %s48
      %p52 = scmp.eq.s32.totalorder %s12, 0
      %p53 = por %p51, %p52
      %p54 = scmp.ne.s32.totalorder %s46, %s48
      %p55 = scmp.eq.s32.totalorder %s17, 1
      %p56 = por %p54, %p55
      %p57 = scmp.ne.s32.totalorder %s48, %s49
      %p58 = scmp.eq.s32.totalorder %s17, 0
      %p59 = por %p57, %p58
      %p60 = scmp.ne.s32.totalorder %s48, %s49
      %p61 = scmp.eq.s32.totalorder %s18, 1
      %p62 = por %p60, %p61
      %p64 = scmp.ne.s32.totalorder %s49, %s63
      %p65 = scmp.eq.s32.totalorder %s18, 0
      %p66 = por %p64, %p65
      %s68 = sadd.s32 %s67, 1
      %p71 = scmp.eq.s32.totalorder %s12, 1
      %p72 = scmp.ne.s32.totalorder %s67, %s69
      %p73 = scmp.eq.s32.totalorder %s12, 0
      %p74 = por %p72, %p73
      %p75 = scmp.ne.s32.totalorder %s67, %s69
      %p76 = scmp.eq.s32.totalorder %s17, 1
      %p77 = por %p75, %p76
      %p78 = scmp.ne.s32.totalorder %s69, %s70
      %p79 = scmp.eq.s32.totalorder %s17, 0
      %p80 = por %p78, %p79
      %p81 = scmp.ne.s32.totalorder %s69, %s70
      %p82 = scmp.eq.s32.totalorder %s18, 1
      %p83 = por %p81, %p82
      %p85 = scmp.ne.s32.totalorder %s70, %s84
      %p86 = scmp.eq.s32.totalorder %s18, 0
      %p87 = por %p85, %p86
      %s88 = ssub.s32 %s12, %s19
      %p89 = scmp.eq.s32.totalorder %s88, 0
      %s91 = sadd.s32 %s90, 1
      %s92 = scalar_select %p89, %s90, %s91
      %p95 = pneg %p89
      %p96 = scmp.eq.s32.totalorder %s12, 1
      %p97 = por %p95, %p96
      %p98 = scmp.ne.s32.totalorder %s90, %s93
      %p99 = scmp.eq.s32.totalorder %s12, 0
      %p100 = por %p98, %p99
      %p101 = scmp.ne.s32.totalorder %s90, %s93
      %p102 = scmp.eq.s32.totalorder %s17, 1
      %p103 = por %p101, %p102
      %p104 = scmp.ne.s32.totalorder %s93, %s94
      %p105 = scmp.eq.s32.totalorder %s17, 0
      %p106 = por %p104, %p105
      %p107 = scmp.ne.s32.totalorder %s93, %s94
      %p108 = scmp.eq.s32.totalorder %s18, 1
      %p109 = por %p107, %p108
      %p111 = scmp.ne.s32.totalorder %s94, %s110
      %p112 = scmp.eq.s32.totalorder %s18, 0
      %p113 = por %p111, %p112
      %p114 = scmp.le.s32.totalorder 1, %s12
      %p115 = scmp.lt.s32.totalorder %s12, 3
      %p116 = pnand %p114, %p115
      %p117 = pneg %p116
      // Predicated region
      $region9: #{tpu_custom_call.1} parent=5 // pred_check
        _
      $region10: #{tpu_custom_call.1} parent=5 // pred_check_branch
        %119 = sbr.rel (%p116) target = $region12
      $region11: #{tpu_custom_call.1} parent=5 // pred_region
        %s120 = ssub.s32 %s12, 1
        // Predicated region
        $region13: #{tpu_custom_call.1} parent=11 // pred_check
          %p121 = pneg %p59
        $region14: #{tpu_custom_call.1} parent=11 // pred_check_branch
          %123 = sbr.rel (%p121) target = $region16
        $region15: #{tpu_custom_call.1} parent=11 // pred_region
          _
        $region16: #{tpu_custom_call.1} parent=11 // pred_fallthru
          _
        // Predicated region
        $region17: #{tpu_custom_call.1} parent=11 // pred_check
          %p124 = pneg %p80
        $region18: #{tpu_custom_call.1} parent=11 // pred_check_branch
          %126 = sbr.rel (%p124) target = $region20
        $region19: #{tpu_custom_call.1} parent=11 // pred_region
          _
        $region20: #{tpu_custom_call.1} parent=11 // pred_fallthru
          _
      $region12: #{tpu_custom_call.1} parent=5 // pred_fallthru
        _
      %p127 = scmp.lt.s32.totalorder %s12, 2
      // Predicated region
      $region21: #{tpu_custom_call.1} parent=5 // pred_check
        %p128 = pneg %p127
      $region22: #{tpu_custom_call.1} parent=5 // pred_check_branch
        %130 = sbr.rel (%p128) target = $region24
      $region23: #{tpu_custom_call.1} parent=5 // pred_region
        // Predicated region
        $region25: #{tpu_custom_call.1} parent=23 // pred_check
          %p131 = pneg %p32
        $region26: #{tpu_custom_call.1} parent=23 // pred_check_branch
          %133 = sbr.rel (%p131) target = $region28
        $region27: #{tpu_custom_call.1} parent=23 // pred_region
          %p134 = scmp.lt.s32.totalorder %s12, 1
          %s135 = scalar_select %p134, %s12, 1
          %s136 = smul.addr %s135, 8
          %s137 = scalar_lea.vmem %s0, %s136
        $region28: #{tpu_custom_call.1} parent=23 // pred_fallthru
          _
      $region24: #{tpu_custom_call.1} parent=5 // pred_fallthru
        _
      %p138 = scmp.le.s32.totalorder 1, %s12
      %p139 = scmp.lt.s32.totalorder %s12, 3
      %p140 = pnand %p138, %p139
      %p141 = pneg %p140
      // Predicated region
      $region29: #{tpu_custom_call.1} parent=5 // pred_check
        _
      $region30: #{tpu_custom_call.1} parent=5 // pred_check_branch
        %143 = sbr.rel (%p140) target = $region32
      $region31: #{tpu_custom_call.1} parent=5 // pred_region
        %s144 = ssub.s32 %s12, 1
        %p145 = scmp.lt.s32.totalorder %s17, 1
        %s146 = scalar_select %p145, %s17, 1
        %s147 = smul.addr %s146, 8
        %s148 = scalar_lea.vmem %s0, %s147
        %p149 = pneg %p38
        %p150 = pneg %p35
        %p151 = pneg %p59
        %p152 = pneg %p56
        %p153 = pneg %p80
        %p154 = pneg %p77
        %p155 = pneg %p106
        %p156 = pneg %p103
        %s157 = sand.u32 %s93, 1
        %s158 = scalar_lea.sflag [#allocation3], %s157
        %s159 = sand.u32 %s93, 1
        %s160 = smul.addr %s159, 8
        %s161 = scalar_lea.vmem [#allocation2], %s160
        %p162 = scmp.lt.s32.totalorder %s17, 1
        %s163 = scalar_select %p162, %s17, 1
        %s164 = smul.addr %s163, 8
        %s165 = scalar_lea.vmem %s0, %s164
        %v166 = vld [vmem:[%s165] sm:$0xff]
        %v167 = vld [vmem:[%s1] sm:$0xff]
        %v168 = vld [vmem:[%s1 + $0x8] sm:$0xff]
        %v169 = vld [vmem:[%s1 + $0x10] sm:$0xff]
        %v170 = vld [vmem:[%s1 + $0x18] sm:$0xff]
        %v171 = vld [vmem:[%s2] sm:$0x1]
        %v173 = vlaneseq
        %v174 = vshrl.u32 %v173, 7
        %v175 = vsub.s32 0, %v174
        %v176 = vrot.slane %v171, %v175
        %vm178 = vcmask 261120
        %v180 = vsel %vm178, %v166, 0
        %182 = vmatprep.subr.mxu0 0.0
        %183 = vmatpush1.msra.mxu0 %v167
        %184 = vmatprep.subr.mxu0 0.0
        %185 = vmatpush1.msra.mxu0 %v168
        %186 = vmatprep.subr.mxu0 0.0
        %187 = vmatpush1.msra.mxu0 %v169
        %188 = vmatprep.subr.mxu0 0.0
        %189 = vmatpush1.msra.mxu0 %v170
        %190 = vmatprep.subr.mxu0 0.0
        %191 = vmatpush1.msra.mxu0 0.0
        %192 = vmatprep.subr.mxu0 0.0
        %193 = vmatpush1.msra.mxu0 0.0
        %194 = vmatprep.subr.mxu0 0.0
        %195 = vmatpush1.msra.mxu0 0.0
        %196 = vmatprep.subr.mxu0 0.0
        %197 = vmatpush1.msra.mxu0 0.0
        %198 = vmatprep.subr.mxu0 0.0
        %199 = vmatpush1.msra.mxu0 0.0
        %200 = vmatprep.subr.mxu0 0.0
        %201 = vmatpush1.msra.mxu0 0.0
        %202 = vmatprep.subr.mxu0 0.0
        %203 = vmatpush1.msra.mxu0 0.0
        %204 = vmatprep.subr.mxu0 0.0
        %205 = vmatpush1.msra.mxu0 0.0
        %206 = vmatprep.subr.mxu0 0.0
        %207 = vmatpush1.msra.mxu0 0.0
        %208 = vmatprep.subr.mxu0 0.0
        %209 = vmatpush1.msra.mxu0 0.0
        %210 = vmatprep.subr.mxu0 0.0
        %211 = vmatpush1.msra.mxu0 0.0
        %212 = vmatprep.subr.mxu0 0.0
        %213 = vmatpush1.msra.mxu0 0.0
        %214 = vmatprep.subr.mxu0 0.0
        %215 = vmatpush1.msra.mxu0 0.0
        %216 = vmatprep.subr.mxu0 0.0
        %217 = vmatpush1.msra.mxu0 0.0
        %218 = vmatprep.subr.mxu0 0.0
        %219 = vmatpush1.msra.mxu0 0.0
        %220 = vmatprep.subr.mxu0 0.0
        %221 = vmatpush1.msra.mxu0 0.0
        %222 = vmatprep.subr.mxu0 0.0
        %223 = vmatpush1.msra.mxu0 0.0
        %224 = vmatprep.subr.mxu0 0.0
        %225 = vmatpush1.msra.mxu0 0.0
        %226 = vmatprep.subr.mxu0 0.0
        %227 = vmatpush1.msra.mxu0 0.0
        %228 = vmatprep.subr.mxu0 0.0
        %229 = vmatpush1.msra.mxu0 0.0
        %230 = vmatprep.subr.mxu0 0.0
        %231 = vmatpush1.msra.mxu0 0.0
        %232 = vmatprep.subr.mxu0 0.0
        %233 = vmatpush1.msra.mxu0 0.0
        %234 = vmatprep.subr.mxu0 0.0
        %235 = vmatpush1.msra.mxu0 0.0
        %236 = vmatprep.subr.mxu0 0.0
        %237 = vmatpush1.msra.mxu0 0.0
        %238 = vmatprep.subr.mxu0 0.0
        %239 = vmatpush1.msra.mxu0 0.0
        %240 = vmatprep.subr.mxu0 0.0
        %241 = vmatpush1.msra.mxu0 0.0
        %242 = vmatprep.subr.mxu0 0.0
        %243 = vmatpush1.msra.mxu0 0.0
        %244 = vmatprep.subr.mxu0 0.0
        %245 = vmatpush1.msra.mxu0 0.0
        %246 = vmatprep.mubr.f32.mxu0 0.0
        %247 = vmatmul.mubr.f32.gmra.mrb[0].mxu0 %v180
        %v248 = vpop.f32.mrb[0].mxu0
        %v249 = vadd.f32 %v176, %v248
        %v250 = vpop.f32.mrb[0].mxu0
        %251 = vdwg.mxu0
        %vm252 = vcmask 130048
        %253 = vst.msk [vmem:[%s161] sm:$0xff] %vm252, %v249
        %s254 = sand.u32 %s93, 1
        %s255 = scalar_lea.sflag [#allocation3], %s254
        %s256 = sand.u32 %s93, 1
        %s257 = smul.addr %s256, 8
        %s258 = scalar_lea.vmem [#allocation2], %s257
        // Predicated region
        $region33: #{tpu_custom_call.1} parent=31 // pred_check
          %p259 = pneg %p103
        $region34: #{tpu_custom_call.1} parent=31 // pred_check_branch
          %261 = sbr.rel (%p259) target = $region36
        $region35: #{tpu_custom_call.1} parent=31 // pred_region
          %s263 = ssub.s32 128, 128
          %264 = vsyncadd %s255, %s263
          %s265 = smul.addr %s17, 128
          %s266 = scalar_lea.hbm %s3, %s265
          %s268 = sshll.u32 %s258, 4
          %s269 = int_to_ptr.vmem [resolvable:$true] %s268
          %271 = dma.vmem_to_hbm [thread:$0]  %s269, 128, %s266, %s255
        $region36: #{tpu_custom_call.1} parent=31 // pred_fallthru
          _
      $region32: #{tpu_custom_call.1} parent=5 // pred_fallthru
        _
      %p272 = scmp.le.s32.totalorder 2, %s12
      // Predicated region
      $region37: #{tpu_custom_call.1} parent=5 // pred_check
        %p273 = pneg %p272
      $region38: #{tpu_custom_call.1} parent=5 // pred_check_branch
        %275 = sbr.rel (%p273) target = $region40
      $region39: #{tpu_custom_call.1} parent=5 // pred_region
        %s276 = ssub.s32 %s12, 2
        // Predicated region
        $region41: #{tpu_custom_call.1} parent=39 // pred_check
          %p277 = pneg %p109
        $region42: #{tpu_custom_call.1} parent=39 // pred_check_branch
          %279 = sbr.rel (%p277) target = $region44
        $region43: #{tpu_custom_call.1} parent=39 // pred_region
          %s280 = sand.u32 %s94, 1
          %s281 = scalar_lea.sflag [#allocation3], %s280
          %s282 = sand.u32 %s94, 1
          %s283 = smul.addr %s282, 8
          %s284 = scalar_lea.vmem [#allocation2], %s283
          %285 = dma.done %s281, 128
        $region44: #{tpu_custom_call.1} parent=39 // pred_fallthru
          _
      $region40: #{tpu_custom_call.1} parent=5 // pred_fallthru
        _
    $region6: #{tpu_custom_call.1} parent=1 // loop_footer
      %s16 = sadd.s32 1, %s12
    $region7: #{tpu_custom_call.1} parent=1 // loop_footer_branch
      %11 = sbr.rel target = $region3
    $region8: #{tpu_custom_call.1} parent=1 // loop_exit
      _
    %286 = vsyncpa [#allocation3], 1
    %s287 = scalar_lea.sflag [#allocation3], 1
    %288 = vsyncpa %s287, 1

</llo_original>
